<compile_context>
chip_gen: v6e
topology: v6e:2x2x1
jax: 0.10.0
libtpu: 0.0.40
codegen_flags: <defaults>
</compile_context>

<pallas_src>
import jax
import jax.numpy as jnp
from jax.experimental import pallas as pl
from jax.experimental.pallas import tpu as pltpu


def _round_up(x, m):
    return (x + m - 1) // m * m


def _pick_tile(n_pad, target):
    """Largest multiple of 128 that divides n_pad and is <= target."""
    t = min(n_pad, target)
    while n_pad % t:
        t -= 128
    return t


def fem_energy_kernel(x_row_ref, x_col_ref, k_ref, f_ref, o_ref, acc_ref):
    """Grid = (column blocks [parallel], row blocks [arbitrary / reduction]).

    Accumulates  kx[:, col_blk] += x[:, row_blk] @ K[row_blk, col_blk]
    across row blocks, then emits the partial energy of the column block:
        sum_j x[:, j] * (0.5 * kx[:, j] - f[:, j])        -> (Bp, 1)
    """
    r = pl.program_id(1)

    @pl.when(r == 0)
    def _():
        acc_ref[...] = jnp.zeros_like(acc_ref)

    # K streams in bf16.  Emulate ~f32 precision for x with a hi/lo bf16
    # split; both matmuls are native bf16 MXU passes with f32 accumulation
    # (the kernel is HBM-bound, so the extra MXU pass is free).
    x32 = x_row_ref[...]
    x_hi = x32.astype(jnp.bfloat16)
    x_lo = (x32 - x_hi.astype(jnp.float32)).astype(jnp.bfloat16)
    k = k_ref[...]
    acc_ref[...] += (
        jnp.dot(x_hi, k, preferred_element_type=jnp.float32)
        + jnp.dot(x_lo, k, preferred_element_type=jnp.float32))

    @pl.when(r == pl.num_programs(1) - 1)
    def _():
        o_ref[...] = jnp.sum(
            x_col_ref[...] * (0.5 * acc_ref[...] - f_ref[...]),
            axis=-1, keepdims=True)


# Tile targets: K block (TR, TN) bf16 = 16 MiB -> 32 MiB double-buffered,
# sized against v7x's 64 MiB per-core VMEM (comfortably fine on v5e/v6e).
# TN stays moderate so the "parallel" column-block axis keeps both v7x
# TensorCores busy for large node counts.
_TR_TARGET = 4096
_TN_TARGET = 2048
_VMEM_LIMIT = 48 * 1024 * 1024


@jax.jit
def _fem_energy_padded(xp, k_pad, f_pad):
    """xp (Bp, Np) f32, k_pad (Np, Np) bf16, f_pad (1, Np) f32 -> (Bp, 1)."""
    Bp, Np = xp.shape
    tr = _pick_tile(Np, _TR_TARGET)
    tn = _pick_tile(Np, _TN_TARGET)
    n_row = Np // tr
    n_col = Np // tn

    partials = pl.pallas_call(
        fem_energy_kernel,
        out_shape=jax.ShapeDtypeStruct((n_col, Bp, 1), jnp.float32),
        grid=(n_col, n_row),
        in_specs=[
            pl.BlockSpec((Bp, tr), lambda j, r: (0, r)),  # x row block (matmul LHS)
            pl.BlockSpec((Bp, tn), lambda j, r: (0, j)),  # x column block (energy term)
            pl.BlockSpec((tr, tn), lambda j, r: (r, j)),  # K tile (bf16, streamed)
            pl.BlockSpec((1, tn), lambda j, r: (0, j)),   # f column block
        ],
        out_specs=pl.BlockSpec((None, Bp, 1), lambda j, r: (j, 0, 0)),
        scratch_shapes=[pltpu.VMEM((Bp, tn), jnp.float32)],
        compiler_params=pltpu.CompilerParams(
            dimension_semantics=("parallel", "arbitrary"),
            vmem_limit_bytes=_VMEM_LIMIT,
        ),
        cost_estimate=pl.CostEstimate(
            flops=4 * Bp * Np * Np + 3 * Bp * Np,
            transcendentals=0,
            bytes_accessed=(2 * Np * Np                   # K (bf16), dominant
                            + 4 * (n_col + 1) * Bp * Np   # x row re-reads + x col
                            + 4 * Np                      # f
                            + 4 * n_col * Bp),            # partial outputs
        ),
    )(xp, xp, k_pad, f_pad)

    # Reduce the tiny (n_col, Bp, 1) column-block partials in the wrapper.
    return jnp.sum(partials, axis=0)


def make_fem_energy(K, f):
    """Pad + cast the constant operator ONCE; return an x -> energy closure."""
    N = K.shape[0]
    Np = _round_up(N, 128)
    k_pad = (jnp.zeros((Np, Np), jnp.bfloat16)
             .at[:N, :N].set(K.astype(jnp.bfloat16)))
    f_pad = (jnp.zeros((1, Np), jnp.float32)
             .at[:, :N].set(f.astype(jnp.float32)))

    def energy(x):
        B, n = x.shape
        assert n == N
        # Pad batch to 16 sublanes (clean bf16 LHS packing); zero rows/cols
        # contribute exactly zero energy.
        Bp = _round_up(max(B, 16), 16)
        xp = (jnp.zeros((Bp, Np), jnp.float32)
              .at[:B, :N].set(x.astype(jnp.float32)))
        return _fem_energy_padded(xp, k_pad, f_pad)[:B]

    return energy


class NetPallas:
    """JAX/Pallas equivalent of the PyTorch `Net` module."""

    def __init__(self, func, node_count, bsz=1):
        self.func = func
        # Matches: torch.rand((bsz, node_count), dtype=torch.float64) * 0.0
        # TODO(synk): float64 parameter kept as float32 (no f64 TPU vector path).
        self.x = jnp.zeros((bsz, node_count), dtype=jnp.float32)

    def forward(self):
        return self.func(self.x)


if __name__ == "__main__":
    BSZ = 2
    NODE_COUNT = 128

    key = jax.random.PRNGKey(0)
    k1, k2, k3 = jax.random.split(key, 3)

    # Deterministic synthetic FEM data: SPD-ish stiffness matrix K and load f.
    A = jax.random.normal(k1, (NODE_COUNT, NODE_COUNT), dtype=jnp.float32)
    K = (A @ A.T) / NODE_COUNT + jnp.eye(NODE_COUNT, dtype=jnp.float32)
    f = jax.random.normal(k2, (1, NODE_COUNT), dtype=jnp.float32)

    # Operator is padded/cast exactly once here and reused for every forward.
    func = make_fem_energy(K, f)

    # --- Module forward exactly as PyTorch: parameter is all zeros ---
    net = NetPallas(func, NODE_COUNT, bsz=BSZ)
    out = jax.block_until_ready(net.forward())
    assert out.shape == (BSZ, 1)
    # Zero parameter -> zero energy.
    assert jnp.allclose(out, jnp.zeros((BSZ, 1), jnp.float32), atol=1e-6)

    # --- Correctness check of the kernel on non-trivial input ---
    x_test = jax.random.normal(k3, (BSZ, NODE_COUNT), dtype=jnp.float32)
    got = jax.block_until_ready(func(x_test))
    # Reference uses the same bf16-truncated K (that truncation is the
    # deliberate HBM-halving choice), computed at high matmul precision.
    K_bf = K.astype(jnp.bfloat16).astype(jnp.float32)
    kx = jnp.dot(x_test, K_bf, precision=jax.lax.Precision.HIGHEST)
    ref = (0.5 * jnp.sum(kx * x_test, axis=-1, keepdims=True)
           - jnp.sum(x_test * f, axis=-1, keepdims=True))
    assert jnp.allclose(got, ref, rtol=1e-3, atol=1e-3), (got, ref)

    print("KERNEL_OK")
</pallas_src>

<mosaic_0001>
module attributes {stable_mosaic.version = 11 : i64} {
  func.func @fem_energy_kernel(%arg0: i32, %arg1: i32, %arg2: memref<16x128xf32, #tpu.memory_space<vmem>>, %arg3: memref<16x128xf32, #tpu.memory_space<vmem>>, %arg4: memref<128x128xbf16, #tpu.memory_space<vmem>>, %arg5: memref<1x128xf32, #tpu.memory_space<vmem>>, %arg6: memref<1x16x1xf32, #tpu.memory_space<vmem>>, %arg7: memref<16x128xf32, #tpu.memory_space<vmem>>) attributes {dimension_semantics = [#tpu.dimension_semantics<parallel>, #tpu.dimension_semantics<arbitrary>], iteration_bounds = array<i64: 1, 1>, scalar_prefetch = 0 : i64, scratch_operands = 1 : i64, tpu.core_type = #tpu.core_type<tc>, window_params = [{transform_indices = @transform_0, window_bounds = array<i64: 16, 128>}, {transform_indices = @transform_1, window_bounds = array<i64: 16, 128>}, {transform_indices = @transform_2, window_bounds = array<i64: 128, 128>}, {transform_indices = @transform_3, window_bounds = array<i64: 1, 128>}, {transform_indices = @transform_4, window_bounds = array<i64: 1, 16, 1>}]} {
    %c0_i32 = arith.constant 0 : i32
    %0 = arith.cmpi eq, %arg1, %c0_i32 : i32
    %1 = arith.extui %0 : i1 to i32
    %c0_i32_0 = arith.constant 0 : i32
    %2 = arith.cmpi ne, %1, %c0_i32_0 : i32
    scf.if %2 {
      %cst_11 = arith.constant 0.000000e+00 : f32
      %18 = vector.broadcast %cst_11 : f32 to vector<16x128xf32>
      %c0_12 = arith.constant 0 : index
      %c0_13 = arith.constant 0 : index
      %19 = vector.load %arg7[%c0_12, %c0_13] : memref<16x128xf32, #tpu.memory_space<vmem>>, vector<16x128xf32>
      tpu.vector_store %arg7[%c0_12, %c0_13], %18 {strides = array<i32>} : memref<16x128xf32, #tpu.memory_space<vmem>>, vector<16x128xf32>,
    } else {
    }
    %c0 = arith.constant 0 : index
    %c0_1 = arith.constant 0 : index
    %3 = vector.load %arg2[%c0, %c0_1] : memref<16x128xf32, #tpu.memory_space<vmem>>, vector<16x128xf32>
    %4 = arith.truncf %3 : vector<16x128xf32> to vector<16x128xbf16>
    %5 = arith.extf %4 : vector<16x128xbf16> to vector<16x128xf32>
    %6 = arith.subf %3, %5 : vector<16x128xf32>
    %7 = arith.truncf %6 : vector<16x128xf32> to vector<16x128xbf16>
    %c0_2 = arith.constant 0 : index
    %c0_3 = arith.constant 0 : index
    %8 = vector.load %arg4[%c0_2, %c0_3] : memref<128x128xbf16, #tpu.memory_space<vmem>>, vector<128x128xbf16>
    %c0_4 = arith.constant 0 : index
    %c0_5 = arith.constant 0 : index
    %9 = vector.load %arg7[%c0_4, %c0_5] : memref<16x128xf32, #tpu.memory_space<vmem>>, vector<16x128xf32>
    %cst = arith.constant dense<0.000000e+00> : vector<16x128xf32>
    %10 = tpu.matmul %4, %8, %cst {dimension_numbers = #tpu.dot_dimension_numbers<[1], [0], [0], [1], [0, 0, 1, 1], [], []>} : vector<16x128xbf16>, vector<128x128xbf16>, vector<16x128xf32> -> vector<16x128xf32>
    %cst_6 = arith.constant dense<0.000000e+00> : vector<16x128xf32>
    %11 = tpu.matmul %7, %8, %cst_6 {dimension_numbers = #tpu.dot_dimension_numbers<[1], [0], [0], [1], [0, 0, 1, 1], [], []>} : vector<16x128xbf16>, vector<128x128xbf16>, vector<16x128xf32> -> vector<16x128xf32>
    %12 = arith.addf %10, %11 : vector<16x128xf32>
    %13 = arith.addf %9, %12 : vector<16x128xf32>
    %c0_7 = arith.constant 0 : index
    %c0_8 = arith.constant 0 : index
    %14 = vector.load %arg7[%c0_7, %c0_8] : memref<16x128xf32, #tpu.memory_space<vmem>>, vector<16x128xf32>
    tpu.vector_store %arg7[%c0_7, %c0_8], %13 {strides = array<i32>} : memref<16x128xf32, #tpu.memory_space<vmem>>, vector<16x128xf32>,
    %c0_i32_9 = arith.constant 0 : i32
    %15 = arith.cmpi eq, %arg1, %c0_i32_9 : i32
    %16 = arith.extui %15 : i1 to i32
    %c0_i32_10 = arith.constant 0 : i32
    %17 = arith.cmpi ne, %16, %c0_i32_10 : i32
    scf.if %17 {
      %c0_11 = arith.constant 0 : index
      %c0_12 = arith.constant 0 : index
      %18 = vector.load %arg3[%c0_11, %c0_12] : memref<16x128xf32, #tpu.memory_space<vmem>>, vector<16x128xf32>
      %c0_13 = arith.constant 0 : index
      %c0_14 = arith.constant 0 : index
      %19 = vector.load %arg7[%c0_13, %c0_14] : memref<16x128xf32, #tpu.memory_space<vmem>>, vector<16x128xf32>
      %cst_15 = arith.constant 5.000000e-01 : f32
      %20 = vector.broadcast %cst_15 : f32 to vector<16x128xf32>
      %21 = arith.mulf %20, %19 : vector<16x128xf32>
      %c0_16 = arith.constant 0 : index
      %c0_17 = arith.constant 0 : index
      %22 = vector.load %arg5[%c0_16, %c0_17] : memref<1x128xf32, #tpu.memory_space<vmem>>, vector<1x128xf32>
      %23 = vector.broadcast %22 : vector<1x128xf32> to vector<16x128xf32>
      %24 = arith.subf %21, %23 : vector<16x128xf32>
      %25 = arith.mulf %18, %24 : vector<16x128xf32>
      %cst_18 = arith.constant dense<0.000000e+00> : vector<16xf32>
      %26 = vector.multi_reduction <add>, %25, %cst_18 [1] : vector<16x128xf32> to vector<16xf32>
      %27 = vector.shape_cast %26 : vector<16xf32> to vector<16x1xf32>
      %c0_19 = arith.constant 0 : index
      %c0_20 = arith.constant 0 : index
      %c0_21 = arith.constant 0 : index
      %28 = vector.load %arg6[%c0_19, %c0_20, %c0_21] : memref<1x16x1xf32, #tpu.memory_space<vmem>>, vector<1x16x1xf32>
      %29 = vector.shape_cast %28 : vector<1x16x1xf32> to vector<16x1xf32>
      %30 = vector.shape_cast %27 : vector<16x1xf32> to vector<1x16x1xf32>
      tpu.vector_store %arg6[%c0_19, %c0_20, %c0_21], %30 {strides = array<i32>} : memref<1x16x1xf32, #tpu.memory_space<vmem>>, vector<1x16x1xf32>,
    } else {
    }
    return
  }
  func.func @transform_0(%arg0: i32, %arg1: i32) -> (i32, i32) {
    %c0_i32 = arith.constant 0 : i32
    %c0_i32_0 = arith.constant 0 : i32
    return %c0_i32, %arg1 : i32, i32
  }
  func.func @transform_1(%arg0: i32, %arg1: i32) -> (i32, i32) {
    %c0_i32 = arith.constant 0 : i32
    %c0_i32_0 = arith.constant 0 : i32
    return %c0_i32, %arg0 : i32, i32
  }
  func.func @transform_2(%arg0: i32, %arg1: i32) -> (i32, i32) {
    %c0_i32 = arith.constant 0 : i32
    return %arg1, %arg0 : i32, i32
  }
  func.func @transform_3(%arg0: i32, %arg1: i32) -> (i32, i32) {
    %c0_i32 = arith.constant 0 : i32
    %c0_i32_0 = arith.constant 0 : i32
    return %c0_i32, %arg0 : i32, i32
  }
  func.func @transform_4(%arg0: i32, %arg1: i32) -> (i32, i32, i32) {
    %c0_i32 = arith.constant 0 : i32
    %c0_i32_0 = arith.constant 0 : i32
    %c0_i32_1 = arith.constant 0 : i32
    return %arg0, %c0_i32, %c0_i32_0 : i32, i32, i32
  }
}

</mosaic_0001>

<llo_original>
// kernel: _fem_energy_padded.1
$region0: #{_fem_energy_padded.1}
  #allocation0 [shape = 'u32[]', space=smem, size = 0x4, offset = 0x4, fixed_abs, tag = 'smem constant byte address 0x4 - core index']
  #allocation1 [shape = 'u32[144,128]{1,0:T(1,128)}', space=vmem, size = 0x12000, scoped, tag = 'internal scratch']
  #allocation2 [shape = 'f32[16,128]{1,0:T(8,128)}', space=vmem, size = 0x2000, scoped, tag = 'scratch operand']
  %s0 = inlined_call_operand.hbm [shape: f32[16,128], index: 0, kind: input, shape index: {}, may-alias: {0,1}]
  %s1 = inlined_call_operand.hbm [shape: f32[16,128], index: 1, kind: input, shape index: {}, may-alias: {0,1}]
  %s2 = inlined_call_operand.hbm [shape: bf16[128,128], index: 2, kind: input, shape index: {}]
  %s3 = inlined_call_operand.vmem [shape: f32[1,128], index: 3, kind: input, shape index: {}]
  %s4 = inlined_call_operand.vmem [shape: f32[1,16,1], index: 4, kind: output, shape index: {}]
  %s5 = sld [smem:[#allocation0]]
  $region46: #{_fem_energy_padded.1} parent=0
    _
  %s7 = ssub.s32 1, %s5
  %s8 = scalar_select 0, %s7, %s5
  $region1: #{_fem_energy_padded.1} parent=0
    #allocation3 [shape = 'u8[8192]{0}', space=vmem, size = 0x2000, scoped, tag = 'input window, operand 0, single buffered']
    #allocation4 [shape = 's32[1]{0}', space=sflag, size = 0x4, scoped, tag = 'scoped memory for _fem_energy_padded.1']
    #allocation5 [shape = 'u8[8192]{0}', space=vmem, size = 0x2000, scoped, tag = 'input window, operand 1, single buffered']
    #allocation6 [shape = 's32[1]{0}', space=sflag, size = 0x4, scoped, tag = 'scoped memory for _fem_energy_padded.1']
    #allocation7 [shape = 'u8[32768]{0}', space=vmem, size = 0x8000, scoped, tag = 'input window, operand 2, single buffered']
    %9 = vsyncpa [#allocation4], 0
    %10 = vsyncpa [#allocation6], 0
    // Predicated region
    $region2: #{_fem_energy_padded.1} parent=1 // pred_check
      _
    $region3: #{_fem_energy_padded.1} parent=1 // pred_check_branch
      %12 = sbr.rel (0) target = $region5
    $region4: #{_fem_energy_padded.1} parent=1 // pred_region
      %s14 = ssub.s32 256, 256
      %15 = vsyncadd [#allocation4], %s14
      %s16 = sshll.u32 [#allocation3], 4
      %s17 = int_to_ptr.vmem [resolvable:$true] %s16
      %22 = dma.hbm_to_vmem [thread:$0]  %s0, 256, %s17, [#allocation4], 128, 128, 8
    $region5: #{_fem_energy_padded.1} parent=1 // pred_fallthru
      _
    // Predicated region
    $region6: #{_fem_energy_padded.1} parent=1 // pred_check
      _
    $region7: #{_fem_energy_padded.1} parent=1 // pred_check_branch
      %24 = sbr.rel (0) target = $region9
    $region8: #{_fem_energy_padded.1} parent=1 // pred_region
      %s26 = ssub.s32 256, 256
      %27 = vsyncadd [#allocation6], %s26
      %s28 = sshll.u32 [#allocation5], 4
      %s29 = int_to_ptr.vmem [resolvable:$true] %s28
      %34 = dma.hbm_to_vmem [thread:$0]  %s1, 256, %s29, [#allocation6], 128, 128, 8
    $region9: #{_fem_energy_padded.1} parent=1 // pred_fallthru
      _
    // Predicated region
    $region10: #{_fem_energy_padded.1} parent=1 // pred_check
      _
    $region11: #{_fem_energy_padded.1} parent=1 // pred_check_branch
      %36 = sbr.rel (0) target = $region13
    $region12: #{_fem_energy_padded.1} parent=1 // pred_region
      %s38 = ssub.s32 1024, 1024
      %39 = vsyncadd [#allocation6], %s38
      %s40 = sshll.u32 [#allocation7], 4
      %s41 = int_to_ptr.vmem [resolvable:$true] %s40
      %46 = dma.hbm_to_vmem [thread:$0]  %s2, 1024, %s41, [#allocation6], 64, 64, 4
    $region13: #{_fem_energy_padded.1} parent=1 // pred_fallthru
      _
    // Predicated region
    $region14: #{_fem_energy_padded.1} parent=1 // pred_check
      _
    $region15: #{_fem_energy_padded.1} parent=1 // pred_check_branch
      %48 = sbr.rel (0) target = $region17
    $region16: #{_fem_energy_padded.1} parent=1 // pred_region
      _
    $region17: #{_fem_energy_padded.1} parent=1 // pred_fallthru
      _
    // Predicated region
    $region18: #{_fem_energy_padded.1} parent=1 // pred_check
      _
    $region19: #{_fem_energy_padded.1} parent=1 // pred_check_branch
      %50 = sbr.rel (0) target = $region21
    $region20: #{_fem_energy_padded.1} parent=1 // pred_region
      %51 = dma.done [#allocation4], 256
    $region21: #{_fem_energy_padded.1} parent=1 // pred_fallthru
      _
    // Predicated region
    $region22: #{_fem_energy_padded.1} parent=1 // pred_check
      _
    $region23: #{_fem_energy_padded.1} parent=1 // pred_check_branch
      %53 = sbr.rel (0) target = $region25
    $region24: #{_fem_energy_padded.1} parent=1 // pred_region
      %54 = dma.done [#allocation6], 256
    $region25: #{_fem_energy_padded.1} parent=1 // pred_fallthru
      _
    // Predicated region
    $region26: #{_fem_energy_padded.1} parent=1 // pred_check
      _
    $region27: #{_fem_energy_padded.1} parent=1 // pred_check_branch
      %56 = sbr.rel (0) target = $region29
    $region28: #{_fem_energy_padded.1} parent=1 // pred_region
      %57 = dma.done [#allocation6], 1024
    $region29: #{_fem_energy_padded.1} parent=1 // pred_fallthru
      _
    %p59 = scmp.eq.s32.totalorder 0, 0
    // Predicated region
    $region30: #{_fem_energy_padded.1} parent=1 // pred_check
      %p60 = pneg %p59
    $region31: #{_fem_energy_padded.1} parent=1 // pred_check_branch
      %62 = sbr.rel (%p60) target = $region33
    $region32: #{_fem_energy_padded.1} parent=1 // pred_region
      %63 = vst [vmem:[#allocation2] sm:$0xff] 0.0
      %64 = vst [vmem:[#allocation2 + $0x8] sm:$0xff] 0.0
    $region33: #{_fem_energy_padded.1} parent=1 // pred_fallthru
      _
    %v65 = vld [vmem:[#allocation3] sm:$0xff]
    %v66 = vld [vmem:[#allocation3 + $0x8] sm:$0xff]
    %v67 = vpack.c.bf16 %v66, %v65
    %v68 = vunpack.c.l.bf16 %v67
    %v69 = vunpack.c.h.bf16 %v67
    %v70 = vsub.f32 %v65, %v68
    %v71 = vsub.f32 %v66, %v69
    %v72 = vpack.c.bf16 %v71, %v70
    %v73 = vld [vmem:[#allocation7] sm:$0xf]
    %v74 = vld [vmem:[#allocation7 + $0x4] sm:$0xf]
    %v75 = vld [vmem:[#allocation7 + $0x8] sm:$0xf]
    %v76 = vld [vmem:[#allocation7 + $0xc] sm:$0xf]
    %v77 = vld [vmem:[#allocation7 + $0x10] sm:$0xf]
    %v78 = vld [vmem:[#allocation7 + $0x14] sm:$0xf]
    %v79 = vld [vmem:[#allocation7 + $0x18] sm:$0xf]
    %v80 = vld [vmem:[#allocation7 + $0x1c] sm:$0xf]
    %v81 = vld [vmem:[#allocation7 + $0x20] sm:$0xf]
    %v82 = vld [vmem:[#allocation7 + $0x24] sm:$0xf]
    %v83 = vld [vmem:[#allocation7 + $0x28] sm:$0xf]
    %v84 = vld [vmem:[#allocation7 + $0x2c] sm:$0xf]
    %v85 = vld [vmem:[#allocation7 + $0x30] sm:$0xf]
    %v86 = vld [vmem:[#allocation7 + $0x34] sm:$0xf]
    %v87 = vld [vmem:[#allocation7 + $0x38] sm:$0xf]
    %v88 = vld [vmem:[#allocation7 + $0x3c] sm:$0xf]
    %v89 = vld [vmem:[#allocation2] sm:$0xff]
    %v90 = vld [vmem:[#allocation2 + $0x8] sm:$0xff]
    %v107 = vunpack.c.l.b16 %v73
    %v108 = vunpack.c.l.b16 %v74
    %v109 = vunpack.c.l.b16 %v75
    %v110 = vunpack.c.l.b16 %v76
    %v111 = vunpack.c.l.b16 %v77
    %v112 = vunpack.c.l.b16 %v78
    %v113 = vunpack.c.l.b16 %v79
    %v114 = vunpack.c.l.b16 %v80
    %v115 = vunpack.c.l.b16 %v81
    %v116 = vunpack.c.l.b16 %v82
    %v117 = vunpack.c.l.b16 %v83
    %v118 = vunpack.c.l.b16 %v84
    %v119 = vunpack.c.l.b16 %v85
    %v120 = vunpack.c.l.b16 %v86
    %v121 = vunpack.c.l.b16 %v87
    %v122 = vunpack.c.l.b16 %v88
    %v123 = vpack.c.b16 %v108, %v107
    %v124 = vpack.c.b16 %v110, %v109
    %v125 = vpack.c.b16 %v112, %v111
    %v126 = vpack.c.b16 %v114, %v113
    %v127 = vpack.c.b16 %v116, %v115
    %v128 = vpack.c.b16 %v118, %v117
    %v129 = vpack.c.b16 %v120, %v119
    %v130 = vpack.c.b16 %v122, %v121
    %139 = vmatprep.subr.bf16.mxu0 0
    %140 = vmatpush1.bf16.msra.mxu0 %v130
    %141 = vmatprep.subr.bf16.mxu0 0
    %142 = vmatpush1.bf16.msra.mxu0 %v129
    %143 = vmatprep.subr.bf16.mxu0 0
    %144 = vmatpush1.bf16.msra.mxu0 %v128
    %145 = vmatprep.subr.bf16.mxu0 0
    %146 = vmatpush1.bf16.msra.mxu0 %v127
    %147 = vmatprep.subr.bf16.mxu0 0
    %148 = vmatpush1.bf16.msra.mxu0 %v126
    %149 = vmatprep.subr.bf16.mxu0 0
    %150 = vmatpush1.bf16.msra.mxu0 %v125
    %151 = vmatprep.subr.bf16.mxu0 0
    %152 = vmatpush1.bf16.msra.mxu0 %v124
    %153 = vmatprep.subr.bf16.mxu0 0
    %154 = vmatpush1.bf16.msra.mxu0 %v123
    %155 = vmatprep.subr.bf16.mxu0 0
    %156 = vmatpush2.bf16.msra.mxu0 0
    %157 = vmatprep.subr.bf16.mxu0 0
    %158 = vmatpush2.bf16.msra.mxu0 0
    %159 = vmatprep.subr.bf16.mxu0 0
    %160 = vmatpush2.bf16.msra.mxu0 0
    %161 = vmatprep.subr.bf16.mxu0 0
    %162 = vmatpush2.bf16.msra.mxu0 0
    %163 = vmatprep.subr.bf16.mxu0 0
    %164 = vmatpush2.bf16.msra.mxu0 0
    %165 = vmatprep.subr.bf16.mxu0 0
    %166 = vmatpush2.bf16.msra.mxu0 0
    %167 = vmatprep.subr.bf16.mxu0 0
    %168 = vmatpush2.bf16.msra.mxu0 0
    %169 = vmatprep.subr.bf16.mxu0 0
    %170 = vmatpush2.bf16.msra.mxu0 0
    %171 = vmatprep.mubr.bf16.mxu0 0
    %172 = vmatmul.mubr.bf16.gmra.mxu0 %v72
    %v173 = vpop.f32.mrf.mxu0
    %v174 = vadd.f32 0.0, %v173
    %v175 = vpop.f32.mrf.mxu0
    %v176 = vpop.f32.mrf.mxu0
    %v177 = vadd.f32 0.0, %v176
    %v178 = vpop.f32.mrf.mxu0
    %179 = vdwg.mxu0
    %180 = vmatprep.subr.bf16.mxu0 0
    %181 = vmatpush1.bf16.msra.mxu0 %v130
    %182 = vmatprep.subr.bf16.mxu0 0
    %183 = vmatpush1.bf16.msra.mxu0 %v129
    %184 = vmatprep.subr.bf16.mxu0 0
    %185 = vmatpush1.bf16.msra.mxu0 %v128
    %186 = vmatprep.subr.bf16.mxu0 0
    %187 = vmatpush1.bf16.msra.mxu0 %v127
    %188 = vmatprep.subr.bf16.mxu0 0
    %189 = vmatpush1.bf16.msra.mxu0 %v126
    %190 = vmatprep.subr.bf16.mxu0 0
    %191 = vmatpush1.bf16.msra.mxu0 %v125
    %192 = vmatprep.subr.bf16.mxu0 0
    %193 = vmatpush1.bf16.msra.mxu0 %v124
    %194 = vmatprep.subr.bf16.mxu0 0
    %195 = vmatpush1.bf16.msra.mxu0 %v123
    %196 = vmatprep.subr.bf16.mxu0 0
    %197 = vmatpush2.bf16.msra.mxu0 0
    %198 = vmatprep.subr.bf16.mxu0 0
    %199 = vmatpush2.bf16.msra.mxu0 0
    %200 = vmatprep.subr.bf16.mxu0 0
    %201 = vmatpush2.bf16.msra.mxu0 0
    %202 = vmatprep.subr.bf16.mxu0 0
    %203 = vmatpush2.bf16.msra.mxu0 0
    %204 = vmatprep.subr.bf16.mxu0 0
    %205 = vmatpush2.bf16.msra.mxu0 0
    %206 = vmatprep.subr.bf16.mxu0 0
    %207 = vmatpush2.bf16.msra.mxu0 0
    %208 = vmatprep.subr.bf16.mxu0 0
    %209 = vmatpush2.bf16.msra.mxu0 0
    %210 = vmatprep.subr.bf16.mxu0 0
    %211 = vmatpush2.bf16.msra.mxu0 0
    %212 = vmatprep.mubr.bf16.mxu0 0
    %213 = vmatmul.mubr.bf16.gmra.mxu0 %v67
    %v214 = vpop.f32.mrf.mxu0
    %v215 = vadd.f32 %v174, %v214
    %v216 = vpop.f32.mrf.mxu0
    %v217 = vpop.f32.mrf.mxu0
    %v218 = vadd.f32 %v177, %v217
    %v219 = vpop.f32.mrf.mxu0
    %220 = vdwg.mxu0
    %v221 = vadd.f32 %v89, %v215
    %v222 = vadd.f32 %v90, %v218
    %223 = vst [vmem:[#allocation2] sm:$0xff] %v221
    %224 = vst [vmem:[#allocation2 + $0x8] sm:$0xff] %v222
    // Predicated region
    $region34: #{_fem_energy_padded.1} parent=1 // pred_check
      %p225 = pneg %p59
    $region35: #{_fem_energy_padded.1} parent=1 // pred_check_branch
      %227 = sbr.rel (%p225) target = $region37
    $region36: #{_fem_energy_padded.1} parent=1 // pred_region
      %v228 = vld [vmem:[#allocation5] sm:$0xff]
      %v229 = vld [vmem:[#allocation5 + $0x8] sm:$0xff]
      %v230 = vld [vmem:[#allocation2] sm:$0xff]
      %v231 = vld [vmem:[#allocation2 + $0x8] sm:$0xff]
      %v232 = vmul.f32 %v230, 0.5
      %v233 = vmul.f32 %v231, 0.5
      %v234 = vld [vmem:[%s3] sm:$0x1]
      %v236 = vlaneseq
      %v237 = vshrl.u32 %v236, 7
      %v238 = vsub.s32 0, %v237
      %v239 = vrot.slane %v234, %v238
      %v241 = vsub.f32 %v232, %v239
      %v242 = vsub.f32 %v233, %v239
      %v243 = vmul.f32 %v228, %v241
      %v244 = vmul.f32 %v229, %v242
      %245 = vadd.xlane.f32.xlu0 %v243
      %v246 = vpop.xlane.xlu0 %245
      %247 = vadd.xlane.f32.xlu0 %v244
      %v248 = vpop.xlane.xlu0 %247
      %vm249 = vcmask 7168
      %250 = vst.msk [vmem:[%s4] sm:$0xff] %vm249, %v246
      %251 = vst.msk [vmem:[%s4 + $0x8] sm:$0xff] %vm249, %v248
    $region37: #{_fem_energy_padded.1} parent=1 // pred_fallthru
      _
    // Predicated region
    $region38: #{_fem_energy_padded.1} parent=1 // pred_check
      _
    $region39: #{_fem_energy_padded.1} parent=1 // pred_check_branch
      %253 = sbr.rel (0) target = $region41
    $region40: #{_fem_energy_padded.1} parent=1 // pred_region
      _
    $region41: #{_fem_energy_padded.1} parent=1 // pred_fallthru
      _
    // Predicated region
    $region42: #{_fem_energy_padded.1} parent=1 // pred_check
      _
    $region43: #{_fem_energy_padded.1} parent=1 // pred_check_branch
      %255 = sbr.rel (0) target = $region45
    $region44: #{_fem_energy_padded.1} parent=1 // pred_region
      _
    $region45: #{_fem_energy_padded.1} parent=1 // pred_fallthru
      _
    %256 = vsyncpa [#allocation4], 1
    %257 = vsyncpa [#allocation6], 1

</llo_original>
